<compile_context>
chip_gen: v5e
topology: v5e:2x2
jax: 0.10.0
libtpu: 0.0.40
codegen_flags: <defaults>
</compile_context>

<pallas_src>
import functools

import jax
import jax.numpy as jnp
from jax.experimental import pallas as pl
from jax.experimental.pallas import tpu as pltpu


def _round_up(x, m):
    return ((x + m - 1) // m) * m


def _pad2(a, rows, cols):
    return jnp.pad(a, ((0, rows - a.shape[0]), (0, cols - a.shape[1])))


# ----------------------------- Pallas kernel ---------------------------------
def concatnet_kernel(x_ref,
                     w1_ref, fb1_ref,          # fused [W1|R1] (bf16), bias (f32, zero-padded)
                     w2_ref, fb2_ref,          # fused [W2|R2]
                     w3_ref, b3_ref,           # identity-residual layer
                     w4_ref, fb4_ref,          # fused [W4|R4]
                     wo_ref, bo_ref,           # output layer, N padded to 128
                     out_ref, *, d1, d2):
    """One batch tile. bf16 operands into the MXU, f32 accumulate/elementwise,
    bf16 lane-dense output store. d1/d2 are 128-aligned so slices are lane-aligned."""

    def fused_layer(v_bf16, w_ref, fb_ref, hid):
        # y = [fc(v) | res_fc(v)]; bias lives on the fc half (zeros on the res half).
        y = jnp.dot(v_bf16, w_ref[...], preferred_element_type=jnp.float32) + fb_ref[...]
        return (jnp.maximum(y[:, :hid], 0.0) + y[:, hid:]).astype(jnp.bfloat16)

    x = x_ref[...]                                           # bf16 (tile_c, d0)

    a = fused_layer(x, w1_ref, fb1_ref, d1)                  # d0 -> d1
    a = fused_layer(a, w2_ref, fb2_ref, d2)                  # d1 -> d2

    y3 = jnp.dot(a, w3_ref[...], preferred_element_type=jnp.float32) + b3_ref[...]
    a = (jnp.maximum(y3, 0.0) + a.astype(jnp.float32)).astype(jnp.bfloat16)  # identity res

    a = fused_layer(a, w4_ref, fb4_ref, d1)                  # d2 -> d1

    out = jnp.dot(a, wo_ref[...], preferred_element_type=jnp.float32) + bo_ref[...]
    out_ref[...] = out.astype(out_ref.dtype)                 # bf16, lane-dense (128-wide)


# ------------------------------- params ---------------------------------------
def init_linear(key, fan_in, fan_out, bias=True):
    """PyTorch nn.Linear-style uniform init; weight returned as (in, out)."""
    kw, kb = jax.random.split(key)
    bound = 1.0 / jnp.sqrt(jnp.float32(fan_in))
    w = jax.random.uniform(kw, (fan_in, fan_out), jnp.float32, -bound, bound)
    if not bias:
        return w
    b = jax.random.uniform(kb, (1, fan_out), jnp.float32, -bound, bound)
    return w, b


def make_concatnet_params(key, max_prec, embedding_dim, intermediate_dim, target_dim):
    d_in = max_prec * embedding_dim
    h = intermediate_dim
    dims = [d_in, h, 2 * h, 2 * h, h]
    keys = jax.random.split(key, 9)
    w1, b1 = init_linear(keys[0], dims[0], dims[1])
    r1 = init_linear(keys[1], dims[0], dims[1], bias=False)
    w2, b2 = init_linear(keys[2], dims[1], dims[2])
    r2 = init_linear(keys[3], dims[1], dims[2], bias=False)
    w3, b3 = init_linear(keys[4], dims[2], dims[3])      # dims equal -> identity residual
    w4, b4 = init_linear(keys[5], dims[3], dims[4])
    r4 = init_linear(keys[6], dims[3], dims[4], bias=False)
    wo, bo = init_linear(keys[7], dims[4], target_dim)
    return (w1, b1, r1, w2, b2, r2, w3, b3, w4, b4, r4, wo, bo)


def pack_params(raw_params):
    """Fuse fc+res_fc along the output axis, zero-pad all dims to multiples of 128,
    cast matmul weights to bf16 (biases stay f32)."""
    (w1, b1, r1, w2, b2, r2, w3, b3, w4, b4, r4, wo, bo) = raw_params
    d_in, h = w1.shape
    h2 = w2.shape[1]
    tgt = wo.shape[1]
    d0 = _round_up(d_in, 128)
    d1 = _round_up(h, 128)
    d2 = _round_up(h2, 128)
    n_pad = _round_up(tgt, 128)
    bf = jnp.bfloat16

    w1f = jnp.concatenate([_pad2(w1, d0, d1), _pad2(r1, d0, d1)], axis=1).astype(bf)
    fb1 = jnp.concatenate([_pad2(b1, 1, d1), jnp.zeros((1, d1), jnp.float32)], axis=1)
    w2f = jnp.concatenate([_pad2(w2, d1, d2), _pad2(r2, d1, d2)], axis=1).astype(bf)
    fb2 = jnp.concatenate([_pad2(b2, 1, d2), jnp.zeros((1, d2), jnp.float32)], axis=1)
    w3p = _pad2(w3, d2, d2).astype(bf)
    b3p = _pad2(b3, 1, d2)
    w4f = jnp.concatenate([_pad2(w4, d2, d1), _pad2(r4, d2, d1)], axis=1).astype(bf)
    fb4 = jnp.concatenate([_pad2(b4, 1, d1), jnp.zeros((1, d1), jnp.float32)], axis=1)
    wop = _pad2(wo, d1, n_pad).astype(bf)
    bop = _pad2(bo, 1, n_pad)

    packed = (w1f, fb1, w2f, fb2, w3p, b3p, w4f, fb4, wop, bop)
    dims = dict(d0=d0, d1=d1, d2=d2, n_pad=n_pad)
    return packed, dims


# ------------------------------- tiling ----------------------------------------
def _choose_tiling(C, *, max_tile=1024, align=16):
    """Even row distribution (padding waste < one tile), rows aligned to 16 for bf16,
    default cap 1024 rows/tile (fits v5e's 16 MiB scoped VMEM with margin), and
    >= 2 (even where possible) grid steps so v7x's two TensorCores both get work."""
    c_al = _round_up(max(C, 1), align)
    max_tile = max(align, _round_up(max_tile, align) if max_tile >= align else align)
    n = pl.cdiv(c_al, min(max_tile, c_al))
    if n == 1 and c_al >= 2 * align:
        n = 2                                   # split across v7x's two cores
    if n > 1 and n % 2 == 1:
        n += 1                                  # prefer an even number of steps
    tile = _round_up(pl.cdiv(c_al, n), align)
    n = pl.cdiv(c_al, tile)                     # tile rounding may reduce step count
    return tile, tile * n


# ------------------------------- wrapper --------------------------------------
def concatnet_forward(precs, prec_elem_mask, raw_params, *, mask=True, max_tile_rows=1024):
    """precs: (C, max_prec, embedding_dim); prec_elem_mask: (C, target_dim)."""
    C = precs.shape[0]
    precs_flat = precs.reshape(C, -1).astype(jnp.float32)    # precs.view(C, -1), returned
    d_in = precs_flat.shape[1]
    target_dim = prec_elem_mask.shape[1]

    packed, dims = pack_params(raw_params)
    d0, d1, d2, n_pad = dims["d0"], dims["d1"], dims["d2"], dims["n_pad"]

    tile_c, c_pad = _choose_tiling(C, max_tile=max_tile_rows)

    x = precs_flat.astype(jnp.bfloat16)
    if c_pad != C or d0 != d_in:
        x = jnp.pad(x, ((0, c_pad - C), (0, d0 - d_in)))

    grid = (c_pad // tile_c,)
    kernel = functools.partial(concatnet_kernel, d1=d1, d2=d2)

    weight_specs = [pl.BlockSpec(p.shape, lambda i: (0, 0)) for p in packed]  # resident

    flops_per_row = 2 * (d0 * 2 * d1 + d1 * 2 * d2 + d2 * d2 + d2 * 2 * d1 + d1 * n_pad)
    weight_bytes = sum(int(p.size) * p.dtype.itemsize for p in packed)
    bytes_accessed = int(x.size) * 2 + c_pad * n_pad * 2 + weight_bytes

    out = pl.pallas_call(
        kernel,
        out_shape=jax.ShapeDtypeStruct((c_pad, n_pad), jnp.bfloat16),
        grid=grid,
        in_specs=[pl.BlockSpec((tile_c, d0), lambda i: (i, 0))] + weight_specs,
        out_specs=pl.BlockSpec((tile_c, n_pad), lambda i: (i, 0)),
        compiler_params=pltpu.CompilerParams(dimension_semantics=("parallel",)),
        cost_estimate=pl.CostEstimate(flops=flops_per_row * c_pad,
                                      transcendentals=0,
                                      bytes_accessed=int(bytes_accessed)),
    )(x, *packed)

    # Slice off padding, upcast, and apply the element mask in f32 so the -999
    # sentinel of the original module is exact (not representable in bf16).
    logits = out[:C, :target_dim].astype(jnp.float32)
    if mask:
        logits = jnp.where(prec_elem_mask != 0, logits, jnp.float32(-999.0))
    return logits, precs_flat


# ------------------------------- reference ------------------------------------
def concatnet_ref(precs, prec_elem_mask, raw_params, *, mask=True):
    """Pure-JAX reference mirroring the kernel's bf16-matmul / f32-accumulate math."""
    (w1, b1, r1, w2, b2, r2, w3, b3, w4, b4, r4, wo, bo) = raw_params
    bf = jnp.bfloat16

    def mm(a_bf, w):
        return jnp.dot(a_bf, w.astype(bf), preferred_element_type=jnp.float32)

    def lay(v_bf, w, r, b):
        return (jnp.maximum(mm(v_bf, w) + b, 0.0) + mm(v_bf, r)).astype(bf)

    x = precs.reshape(precs.shape[0], -1).astype(jnp.float32)
    v = x.astype(bf)
    a = lay(v, w1, r1, b1)
    a = lay(a, w2, r2, b2)
    a = (jnp.maximum(mm(a, w3) + b3, 0.0) + a.astype(jnp.float32)).astype(bf)
    a = lay(a, w4, r4, b4)
    out = (mm(a, wo) + bo).astype(bf).astype(jnp.float32)
    if mask:
        out = jnp.where(prec_elem_mask != 0, out, -999.0)
    return out, x


# --------------------------------- main ----------------------------------------
if __name__ == "__main__":
    max_prec = 4
    embedding_dim = 32    # -> D_in = 128
    intermediate_dim = 64
    target_dim = 32

    key = jax.random.PRNGKey(0)
    k_params, k_p1, k_m1, k_p2, k_m2 = jax.random.split(key, 5)

    params = make_concatnet_params(k_params, max_prec, embedding_dim,
                                   intermediate_dim, target_dim)

    # --- case 1: small batch, single tile ---
    C = 8
    precs = jax.random.normal(k_p1, (C, max_prec, embedding_dim), jnp.float32)
    prec_elem_mask = (jax.random.uniform(k_m1, (C, target_dim)) > 0.5).astype(jnp.float32)

    out, precs_flat = concatnet_forward(precs, prec_elem_mask, params, mask=True)
    out = jax.block_until_ready(out)
    precs_flat = jax.block_until_ready(precs_flat)

    ref_out, ref_x = concatnet_ref(precs, prec_elem_mask, params, mask=True)
    assert out.shape == (C, target_dim)
    assert precs_flat.shape == (C, max_prec * embedding_dim)
    assert jnp.allclose(out, ref_out, atol=1e-2, rtol=1e-2), "masked output mismatch"
    assert jnp.allclose(precs_flat, ref_x), "precs_flat mismatch"
    # masked positions carry the exact -999 sentinel of the original module
    assert bool(jnp.all(jnp.where(prec_elem_mask == 0, out, -999.0) == -999.0))

    # unmasked forward (mask=False streams no mask and skips the where entirely)
    out_nm, _ = concatnet_forward(precs, prec_elem_mask, params, mask=False)
    out_nm = jax.block_until_ready(out_nm)
    ref_nm, _ = concatnet_ref(precs, prec_elem_mask, params, mask=False)
    assert jnp.allclose(out_nm, ref_nm, atol=1e-2, rtol=1e-2), "unmasked output mismatch"

    # --- case 2: batch not a multiple of the tile -> multi-step grid + row padding ---
    C2 = 40
    precs2 = jax.random.normal(k_p2, (C2, max_prec, embedding_dim), jnp.float32)
    mask2 = (jax.random.uniform(k_m2, (C2, target_dim)) > 0.5).astype(jnp.float32)

    out2, flat2 = concatnet_forward(precs2, mask2, params, mask=True)
    out2 = jax.block_until_ready(out2)
    ref2, refx2 = concatnet_ref(precs2, mask2, params, mask=True)
    assert out2.shape == (C2, target_dim)
    assert jnp.allclose(out2, ref2, atol=1e-2, rtol=1e-2), "multi-tile output mismatch"
    assert jnp.allclose(flat2, refx2), "multi-tile precs_flat mismatch"

    print("KERNEL_OK")
</pallas_src>

<mosaic_0001>
module attributes {stable_mosaic.version = 11 : i64} {
  func.func @concatnet_kernel(%arg0: i32, %arg1: memref<16x128xbf16, #tpu.memory_space<vmem>>, %arg2: memref<128x256xbf16, #tpu.memory_space<vmem>>, %arg3: memref<1x256xf32, #tpu.memory_space<vmem>>, %arg4: memref<128x256xbf16, #tpu.memory_space<vmem>>, %arg5: memref<1x256xf32, #tpu.memory_space<vmem>>, %arg6: memref<128x128xbf16, #tpu.memory_space<vmem>>, %arg7: memref<1x128xf32, #tpu.memory_space<vmem>>, %arg8: memref<128x256xbf16, #tpu.memory_space<vmem>>, %arg9: memref<1x256xf32, #tpu.memory_space<vmem>>, %arg10: memref<128x128xbf16, #tpu.memory_space<vmem>>, %arg11: memref<1x128xf32, #tpu.memory_space<vmem>>, %arg12: memref<16x128xbf16, #tpu.memory_space<vmem>>) attributes {dimension_semantics = [#tpu.dimension_semantics<parallel>], iteration_bounds = array<i64: 1>, scalar_prefetch = 0 : i64, scratch_operands = 0 : i64, tpu.core_type = #tpu.core_type<tc>, window_params = [{transform_indices = @transform_0, window_bounds = array<i64: 16, 128>}, {pipeline_mode = #tpu.pipeline_mode<synchronous>, transform_indices = @transform_1, window_bounds = array<i64: 128, 256>}, {pipeline_mode = #tpu.pipeline_mode<synchronous>, transform_indices = @transform_2, window_bounds = array<i64: 1, 256>}, {pipeline_mode = #tpu.pipeline_mode<synchronous>, transform_indices = @transform_3, window_bounds = array<i64: 128, 256>}, {pipeline_mode = #tpu.pipeline_mode<synchronous>, transform_indices = @transform_4, window_bounds = array<i64: 1, 256>}, {pipeline_mode = #tpu.pipeline_mode<synchronous>, transform_indices = @transform_5, window_bounds = array<i64: 128, 128>}, {pipeline_mode = #tpu.pipeline_mode<synchronous>, transform_indices = @transform_6, window_bounds = array<i64: 1, 128>}, {pipeline_mode = #tpu.pipeline_mode<synchronous>, transform_indices = @transform_7, window_bounds = array<i64: 128, 256>}, {pipeline_mode = #tpu.pipeline_mode<synchronous>, transform_indices = @transform_8, window_bounds = array<i64: 1, 256>}, {pipeline_mode = #tpu.pipeline_mode<synchronous>, transform_indices = @transform_9, window_bounds = array<i64: 128, 128>}, {pipeline_mode = #tpu.pipeline_mode<synchronous>, transform_indices = @transform_10, window_bounds = array<i64: 1, 128>}, {transform_indices = @transform_11, window_bounds = array<i64: 16, 128>}]} {
    %c0 = arith.constant 0 : index
    %c0_0 = arith.constant 0 : index
    %0 = vector.load %arg1[%c0, %c0_0] : memref<16x128xbf16, #tpu.memory_space<vmem>>, vector<16x128xbf16>
    %c0_1 = arith.constant 0 : index
    %c0_2 = arith.constant 0 : index
    %1 = vector.load %arg2[%c0_1, %c0_2] : memref<128x256xbf16, #tpu.memory_space<vmem>>, vector<128x256xbf16>
    %cst = arith.constant dense<0.000000e+00> : vector<16x256xf32>
    %2 = tpu.matmul %0, %1, %cst {dimension_numbers = #tpu.dot_dimension_numbers<[1], [0], [0], [1], [0, 0, 1, 1], [], []>} : vector<16x128xbf16>, vector<128x256xbf16>, vector<16x256xf32> -> vector<16x256xf32>
    %c0_3 = arith.constant 0 : index
    %c0_4 = arith.constant 0 : index
    %3 = vector.load %arg3[%c0_3, %c0_4] : memref<1x256xf32, #tpu.memory_space<vmem>>, vector<1x256xf32>
    %4 = vector.broadcast %3 : vector<1x256xf32> to vector<16x256xf32>
    %5 = arith.addf %2, %4 : vector<16x256xf32>
    %6 = vector.extract_strided_slice %5 {offsets = [0, 0], sizes = [16, 128], strides = [1, 1]} : vector<16x256xf32> to vector<16x128xf32>
    %cst_5 = arith.constant 0.000000e+00 : f32
    %7 = vector.broadcast %cst_5 : f32 to vector<16x128xf32>
    %8 = arith.maximumf %6, %7 : vector<16x128xf32>
    %9 = vector.extract_strided_slice %5 {offsets = [0, 128], sizes = [16, 128], strides = [1, 1]} : vector<16x256xf32> to vector<16x128xf32>
    %10 = arith.addf %8, %9 : vector<16x128xf32>
    %11 = arith.truncf %10 : vector<16x128xf32> to vector<16x128xbf16>
    %c0_6 = arith.constant 0 : index
    %c0_7 = arith.constant 0 : index
    %12 = vector.load %arg4[%c0_6, %c0_7] : memref<128x256xbf16, #tpu.memory_space<vmem>>, vector<128x256xbf16>
    %cst_8 = arith.constant dense<0.000000e+00> : vector<16x256xf32>
    %13 = tpu.matmul %11, %12, %cst_8 {dimension_numbers = #tpu.dot_dimension_numbers<[1], [0], [0], [1], [0, 0, 1, 1], [], []>} : vector<16x128xbf16>, vector<128x256xbf16>, vector<16x256xf32> -> vector<16x256xf32>
    %c0_9 = arith.constant 0 : index
    %c0_10 = arith.constant 0 : index
    %14 = vector.load %arg5[%c0_9, %c0_10] : memref<1x256xf32, #tpu.memory_space<vmem>>, vector<1x256xf32>
    %15 = vector.broadcast %14 : vector<1x256xf32> to vector<16x256xf32>
    %16 = arith.addf %13, %15 : vector<16x256xf32>
    %17 = vector.extract_strided_slice %16 {offsets = [0, 0], sizes = [16, 128], strides = [1, 1]} : vector<16x256xf32> to vector<16x128xf32>
    %cst_11 = arith.constant 0.000000e+00 : f32
    %18 = vector.broadcast %cst_11 : f32 to vector<16x128xf32>
    %19 = arith.maximumf %17, %18 : vector<16x128xf32>
    %20 = vector.extract_strided_slice %16 {offsets = [0, 128], sizes = [16, 128], strides = [1, 1]} : vector<16x256xf32> to vector<16x128xf32>
    %21 = arith.addf %19, %20 : vector<16x128xf32>
    %22 = arith.truncf %21 : vector<16x128xf32> to vector<16x128xbf16>
    %c0_12 = arith.constant 0 : index
    %c0_13 = arith.constant 0 : index
    %23 = vector.load %arg6[%c0_12, %c0_13] : memref<128x128xbf16, #tpu.memory_space<vmem>>, vector<128x128xbf16>
    %cst_14 = arith.constant dense<0.000000e+00> : vector<16x128xf32>
    %24 = tpu.matmul %22, %23, %cst_14 {dimension_numbers = #tpu.dot_dimension_numbers<[1], [0], [0], [1], [0, 0, 1, 1], [], []>} : vector<16x128xbf16>, vector<128x128xbf16>, vector<16x128xf32> -> vector<16x128xf32>
    %c0_15 = arith.constant 0 : index
    %c0_16 = arith.constant 0 : index
    %25 = vector.load %arg7[%c0_15, %c0_16] : memref<1x128xf32, #tpu.memory_space<vmem>>, vector<1x128xf32>
    %26 = vector.broadcast %25 : vector<1x128xf32> to vector<16x128xf32>
    %27 = arith.addf %24, %26 : vector<16x128xf32>
    %cst_17 = arith.constant 0.000000e+00 : f32
    %28 = vector.broadcast %cst_17 : f32 to vector<16x128xf32>
    %29 = arith.maximumf %27, %28 : vector<16x128xf32>
    %30 = arith.extf %22 : vector<16x128xbf16> to vector<16x128xf32>
    %31 = arith.addf %29, %30 : vector<16x128xf32>
    %32 = arith.truncf %31 : vector<16x128xf32> to vector<16x128xbf16>
    %c0_18 = arith.constant 0 : index
    %c0_19 = arith.constant 0 : index
    %33 = vector.load %arg8[%c0_18, %c0_19] : memref<128x256xbf16, #tpu.memory_space<vmem>>, vector<128x256xbf16>
    %cst_20 = arith.constant dense<0.000000e+00> : vector<16x256xf32>
    %34 = tpu.matmul %32, %33, %cst_20 {dimension_numbers = #tpu.dot_dimension_numbers<[1], [0], [0], [1], [0, 0, 1, 1], [], []>} : vector<16x128xbf16>, vector<128x256xbf16>, vector<16x256xf32> -> vector<16x256xf32>
    %c0_21 = arith.constant 0 : index
    %c0_22 = arith.constant 0 : index
    %35 = vector.load %arg9[%c0_21, %c0_22] : memref<1x256xf32, #tpu.memory_space<vmem>>, vector<1x256xf32>
    %36 = vector.broadcast %35 : vector<1x256xf32> to vector<16x256xf32>
    %37 = arith.addf %34, %36 : vector<16x256xf32>
    %38 = vector.extract_strided_slice %37 {offsets = [0, 0], sizes = [16, 128], strides = [1, 1]} : vector<16x256xf32> to vector<16x128xf32>
    %cst_23 = arith.constant 0.000000e+00 : f32
    %39 = vector.broadcast %cst_23 : f32 to vector<16x128xf32>
    %40 = arith.maximumf %38, %39 : vector<16x128xf32>
    %41 = vector.extract_strided_slice %37 {offsets = [0, 128], sizes = [16, 128], strides = [1, 1]} : vector<16x256xf32> to vector<16x128xf32>
    %42 = arith.addf %40, %41 : vector<16x128xf32>
    %43 = arith.truncf %42 : vector<16x128xf32> to vector<16x128xbf16>
    %c0_24 = arith.constant 0 : index
    %c0_25 = arith.constant 0 : index
    %44 = vector.load %arg10[%c0_24, %c0_25] : memref<128x128xbf16, #tpu.memory_space<vmem>>, vector<128x128xbf16>
    %cst_26 = arith.constant dense<0.000000e+00> : vector<16x128xf32>
    %45 = tpu.matmul %43, %44, %cst_26 {dimension_numbers = #tpu.dot_dimension_numbers<[1], [0], [0], [1], [0, 0, 1, 1], [], []>} : vector<16x128xbf16>, vector<128x128xbf16>, vector<16x128xf32> -> vector<16x128xf32>
    %c0_27 = arith.constant 0 : index
    %c0_28 = arith.constant 0 : index
    %46 = vector.load %arg11[%c0_27, %c0_28] : memref<1x128xf32, #tpu.memory_space<vmem>>, vector<1x128xf32>
    %47 = vector.broadcast %46 : vector<1x128xf32> to vector<16x128xf32>
    %48 = arith.addf %45, %47 : vector<16x128xf32>
    %49 = arith.truncf %48 : vector<16x128xf32> to vector<16x128xbf16>
    %c0_29 = arith.constant 0 : index
    %c0_30 = arith.constant 0 : index
    %50 = vector.load %arg12[%c0_29, %c0_30] : memref<16x128xbf16, #tpu.memory_space<vmem>>, vector<16x128xbf16>
    tpu.vector_store %arg12[%c0_29, %c0_30], %49 {strides = array<i32>} : memref<16x128xbf16, #tpu.memory_space<vmem>>, vector<16x128xbf16>,
    return
  }
  func.func @transform_0(%arg0: i32) -> (i32, i32) {
    %c0_i32 = arith.constant 0 : i32
    %c0_i32_0 = arith.constant 0 : i32
    return %arg0, %c0_i32 : i32, i32
  }
  func.func @transform_1(%arg0: i32) -> (i32, i32) {
    %c0_i32 = arith.constant 0 : i32
    %c0_i32_0 = arith.constant 0 : i32
    %c0_i32_1 = arith.constant 0 : i32
    return %c0_i32, %c0_i32_0 : i32, i32
  }
  func.func @transform_2(%arg0: i32) -> (i32, i32) {
    %c0_i32 = arith.constant 0 : i32
    %c0_i32_0 = arith.constant 0 : i32
    %c0_i32_1 = arith.constant 0 : i32
    return %c0_i32, %c0_i32_0 : i32, i32
  }
  func.func @transform_3(%arg0: i32) -> (i32, i32) {
    %c0_i32 = arith.constant 0 : i32
    %c0_i32_0 = arith.constant 0 : i32
    %c0_i32_1 = arith.constant 0 : i32
    return %c0_i32, %c0_i32_0 : i32, i32
  }
  func.func @transform_4(%arg0: i32) -> (i32, i32) {
    %c0_i32 = arith.constant 0 : i32
    %c0_i32_0 = arith.constant 0 : i32
    %c0_i32_1 = arith.constant 0 : i32
    return %c0_i32, %c0_i32_0 : i32, i32
  }
  func.func @transform_5(%arg0: i32) -> (i32, i32) {
    %c0_i32 = arith.constant 0 : i32
    %c0_i32_0 = arith.constant 0 : i32
    %c0_i32_1 = arith.constant 0 : i32
    return %c0_i32, %c0_i32_0 : i32, i32
  }
  func.func @transform_6(%arg0: i32) -> (i32, i32) {
    %c0_i32 = arith.constant 0 : i32
    %c0_i32_0 = arith.constant 0 : i32
    %c0_i32_1 = arith.constant 0 : i32
    return %c0_i32, %c0_i32_0 : i32, i32
  }
  func.func @transform_7(%arg0: i32) -> (i32, i32) {
    %c0_i32 = arith.constant 0 : i32
    %c0_i32_0 = arith.constant 0 : i32
    %c0_i32_1 = arith.constant 0 : i32
    return %c0_i32, %c0_i32_0 : i32, i32
  }
  func.func @transform_8(%arg0: i32) -> (i32, i32) {
    %c0_i32 = arith.constant 0 : i32
    %c0_i32_0 = arith.constant 0 : i32
    %c0_i32_1 = arith.constant 0 : i32
    return %c0_i32, %c0_i32_0 : i32, i32
  }
  func.func @transform_9(%arg0: i32) -> (i32, i32) {
    %c0_i32 = arith.constant 0 : i32
    %c0_i32_0 = arith.constant 0 : i32
    %c0_i32_1 = arith.constant 0 : i32
    return %c0_i32, %c0_i32_0 : i32, i32
  }
  func.func @transform_10(%arg0: i32) -> (i32, i32) {
    %c0_i32 = arith.constant 0 : i32
    %c0_i32_0 = arith.constant 0 : i32
    %c0_i32_1 = arith.constant 0 : i32
    return %c0_i32, %c0_i32_0 : i32, i32
  }
  func.func @transform_11(%arg0: i32) -> (i32, i32) {
    %c0_i32 = arith.constant 0 : i32
    %c0_i32_0 = arith.constant 0 : i32
    return %arg0, %c0_i32 : i32, i32
  }
}

</mosaic_0001>

<llo_original>
// kernel: tpu_custom_call.1
$region0: #{tpu_custom_call.1}
  #allocation0 [shape = 'u32[]', space=smem, size = 0x4, offset = 0x4, fixed_abs, tag = 'smem constant byte address 0x4 - core index']
  #allocation1 [shape = 'u32[72,128]{1,0:T(1,128)}', space=vmem, size = 0x9000, scoped, tag = 'internal scratch']
  %s0 = inlined_call_operand.hbm [shape: bf16[16,128], index: 0, kind: input, shape index: {}]
  %s1 = inlined_call_operand.hbm [shape: bf16[128,256], index: 1, kind: input, shape index: {}]
  %s2 = inlined_call_operand.hbm [shape: f32[1,256], index: 2, kind: input, shape index: {}]
  %s3 = inlined_call_operand.hbm [shape: bf16[128,256], index: 3, kind: input, shape index: {}]
  %s4 = inlined_call_operand.vmem [shape: f32[1,256], index: 4, kind: input, shape index: {}]
  %s5 = inlined_call_operand.hbm [shape: bf16[128,128], index: 5, kind: input, shape index: {}]
  %s6 = inlined_call_operand.vmem [shape: f32[1,128], index: 6, kind: input, shape index: {}]
  %s7 = inlined_call_operand.hbm [shape: bf16[128,256], index: 7, kind: input, shape index: {}]
  %s8 = inlined_call_operand.vmem [shape: f32[1,256], index: 8, kind: input, shape index: {}]
  %s9 = inlined_call_operand.hbm [shape: bf16[128,128], index: 9, kind: input, shape index: {}]
  %s10 = inlined_call_operand.vmem [shape: f32[1,128], index: 10, kind: input, shape index: {}]
  %s11 = inlined_call_operand.hbm [shape: bf16[16,128], index: 11, kind: output, shape index: {}]
  %s12 = sld [smem:[#allocation0]]
  $region82: #{tpu_custom_call.1} parent=0
    _
  %s14 = ssub.s32 1, %s12
  %s15 = scalar_select 0, %s14, %s12
  $region1: #{tpu_custom_call.1} parent=0
    #allocation2 [shape = 'u8[4096]{0}', space=vmem, size = 0x1000, scoped, tag = 'input window, operand 0, single buffered']
    #allocation3 [shape = 's32[1]{0}', space=sflag, size = 0x4, scoped, tag = 'scoped memory for tpu_custom_call.1']
    #allocation4 [shape = 's32[1]{0}', space=sflag, size = 0x4, scoped, tag = 'scoped memory for tpu_custom_call.1']
    #allocation5 [shape = 'u8[65536]{0}', space=vmem, size = 0x10000, scoped, tag = 'input window, operand 1, single buffered']
    #allocation6 [shape = 's32[1]{0}', space=sflag, size = 0x4, scoped, tag = 'scoped memory for tpu_custom_call.1']
    #allocation7 [shape = 'u8[1024]{0}', space=vmem, size = 0x400, scoped, tag = 'input window, operand 2, single buffered']
    #allocation8 [shape = 'u8[65536]{0}', space=vmem, size = 0x10000, scoped, tag = 'input window, operand 3, single buffered']
    #allocation9 [shape = 's32[1]{0}', space=sflag, size = 0x4, scoped, tag = 'scoped memory for tpu_custom_call.1']
    #allocation10 [shape = 'u8[32768]{0}', space=vmem, size = 0x8000, scoped, tag = 'input window, operand 5, single buffered']
    #allocation11 [shape = 'u8[65536]{0}', space=vmem, size = 0x10000, scoped, tag = 'input window, operand 7, single buffered']
    #allocation12 [shape = 's32[1]{0}', space=sflag, size = 0x4, scoped, tag = 'scoped memory for tpu_custom_call.1']
    #allocation13 [shape = 'u8[32768]{0}', space=vmem, size = 0x8000, scoped, tag = 'input window, operand 9, single buffered']
    #allocation14 [shape = 'u8[4096]{0}', space=vmem, size = 0x1000, scoped, tag = 'output window, operand 0, single buffered']
    %16 = vsyncpa [#allocation3], 0
    %17 = vsyncpa [#allocation6], 0
    %18 = vsyncpa [#allocation9], 0
    %19 = vsyncpa [#allocation12], 0
    %20 = vsyncpa [#allocation4], 0
    // Predicated region
    $region2: #{tpu_custom_call.1} parent=1 // pred_check
      _
    $region3: #{tpu_custom_call.1} parent=1 // pred_check_branch
      %22 = sbr.rel (0) target = $region5
    $region4: #{tpu_custom_call.1} parent=1 // pred_region
      %24 = vsyncadd [#allocation3], 0
      %s25 = sshll.u32 %s0, 4
      %s26 = int_to_ptr.hbm [resolvable:$true] %s25
      %s27 = sshll.u32 [#allocation2], 4
      %s28 = int_to_ptr.vmem [resolvable:$true] %s27
      %33 = dma.hbm_to_vmem [thread:$0]  %s26, 128, %s28, [#allocation3], 64, 64, 4
    $region5: #{tpu_custom_call.1} parent=1 // pred_fallthru
      _
    // Predicated region
    $region6: #{tpu_custom_call.1} parent=1 // pred_check
      _
    $region7: #{tpu_custom_call.1} parent=1 // pred_check_branch
      %35 = sbr.rel (0) target = $region9
    $region8: #{tpu_custom_call.1} parent=1 // pred_region
      %37 = vsyncadd [#allocation6], 0
      %s38 = sshll.u32 %s1, 4
      %s39 = int_to_ptr.hbm [resolvable:$true] %s38
      %s40 = sshll.u32 [#allocation5], 4
      %s41 = int_to_ptr.vmem [resolvable:$true] %s40
      %46 = dma.hbm_to_vmem [thread:$0]  %s39, 2048, %s41, [#allocation6], 128, 128, 8
    $region9: #{tpu_custom_call.1} parent=1 // pred_fallthru
      _
    // Predicated region
    $region10: #{tpu_custom_call.1} parent=1 // pred_check
      _
    $region11: #{tpu_custom_call.1} parent=1 // pred_check_branch
      %48 = sbr.rel (0) target = $region13
    $region12: #{tpu_custom_call.1} parent=1 // pred_region
      %50 = vsyncadd [#allocation6], 0
      %s52 = sshll.u32 %s2, 4
      %s53 = int_to_ptr.hbm [resolvable:$true] %s52
      %s54 = sshll.u32 [#allocation7], 4
      %s55 = int_to_ptr.vmem [resolvable:$true] %s54
      %57 = dma.hbm_to_vmem [thread:$0]  %s53, 32, %s55, [#allocation6]
    $region13: #{tpu_custom_call.1} parent=1 // pred_fallthru
      _
    // Predicated region
    $region14: #{tpu_custom_call.1} parent=1 // pred_check
      _
    $region15: #{tpu_custom_call.1} parent=1 // pred_check_branch
      %59 = sbr.rel (0) target = $region17
    $region16: #{tpu_custom_call.1} parent=1 // pred_region
      %61 = vsyncadd [#allocation9], 0
      %s62 = sshll.u32 %s3, 4
      %s63 = int_to_ptr.hbm [resolvable:$true] %s62
      %s64 = sshll.u32 [#allocation8], 4
      %s65 = int_to_ptr.vmem [resolvable:$true] %s64
      %70 = dma.hbm_to_vmem [thread:$0]  %s63, 2048, %s65, [#allocation9], 128, 128, 8
    $region17: #{tpu_custom_call.1} parent=1 // pred_fallthru
      _
    // Predicated region
    $region18: #{tpu_custom_call.1} parent=1 // pred_check
      _
    $region19: #{tpu_custom_call.1} parent=1 // pred_check_branch
      %72 = sbr.rel (0) target = $region21
    $region20: #{tpu_custom_call.1} parent=1 // pred_region
      _
    $region21: #{tpu_custom_call.1} parent=1 // pred_fallthru
      _
    // Predicated region
    $region22: #{tpu_custom_call.1} parent=1 // pred_check
      _
    $region23: #{tpu_custom_call.1} parent=1 // pred_check_branch
      %74 = sbr.rel (0) target = $region25
    $region24: #{tpu_custom_call.1} parent=1 // pred_region
      %76 = vsyncadd [#allocation9], 0
      %s77 = sshll.u32 %s5, 4
      %s78 = int_to_ptr.hbm [resolvable:$true] %s77
      %s79 = sshll.u32 [#allocation10], 4
      %s80 = int_to_ptr.vmem [resolvable:$true] %s79
      %85 = dma.hbm_to_vmem [thread:$0]  %s78, 1024, %s80, [#allocation9], 64, 64, 4
    $region25: #{tpu_custom_call.1} parent=1 // pred_fallthru
      _
    // Predicated region
    $region26: #{tpu_custom_call.1} parent=1 // pred_check
      _
    $region27: #{tpu_custom_call.1} parent=1 // pred_check_branch
      %87 = sbr.rel (0) target = $region29
    $region28: #{tpu_custom_call.1} parent=1 // pred_region
      _
    $region29: #{tpu_custom_call.1} parent=1 // pred_fallthru
      _
    // Predicated region
    $region30: #{tpu_custom_call.1} parent=1 // pred_check
      _
    $region31: #{tpu_custom_call.1} parent=1 // pred_check_branch
      %89 = sbr.rel (0) target = $region33
    $region32: #{tpu_custom_call.1} parent=1 // pred_region
      %91 = vsyncadd [#allocation12], 0
      %s92 = sshll.u32 %s7, 4
      %s93 = int_to_ptr.hbm [resolvable:$true] %s92
      %s94 = sshll.u32 [#allocation11], 4
      %s95 = int_to_ptr.vmem [resolvable:$true] %s94
      %100 = dma.hbm_to_vmem [thread:$0]  %s93, 2048, %s95, [#allocation12], 128, 128, 8
    $region33: #{tpu_custom_call.1} parent=1 // pred_fallthru
      _
    // Predicated region
    $region34: #{tpu_custom_call.1} parent=1 // pred_check
      _
    $region35: #{tpu_custom_call.1} parent=1 // pred_check_branch
      %102 = sbr.rel (0) target = $region37
    $region36: #{tpu_custom_call.1} parent=1 // pred_region
      _
    $region37: #{tpu_custom_call.1} parent=1 // pred_fallthru
      _
    // Predicated region
    $region38: #{tpu_custom_call.1} parent=1 // pred_check
      _
    $region39: #{tpu_custom_call.1} parent=1 // pred_check_branch
      %104 = sbr.rel (0) target = $region41
    $region40: #{tpu_custom_call.1} parent=1 // pred_region
      %106 = vsyncadd [#allocation12], 0
      %s107 = sshll.u32 %s9, 4
      %s108 = int_to_ptr.hbm [resolvable:$true] %s107
      %s109 = sshll.u32 [#allocation13], 4
      %s110 = int_to_ptr.vmem [resolvable:$true] %s109
      %115 = dma.hbm_to_vmem [thread:$0]  %s108, 1024, %s110, [#allocation12], 64, 64, 4
    $region41: #{tpu_custom_call.1} parent=1 // pred_fallthru
      _
    // Predicated region
    $region42: #{tpu_custom_call.1} parent=1 // pred_check
      _
    $region43: #{tpu_custom_call.1} parent=1 // pred_check_branch
      %117 = sbr.rel (0) target = $region45
    $region44: #{tpu_custom_call.1} parent=1 // pred_region
      _
    $region45: #{tpu_custom_call.1} parent=1 // pred_fallthru
      _
    // Predicated region
    $region46: #{tpu_custom_call.1} parent=1 // pred_check
      _
    $region47: #{tpu_custom_call.1} parent=1 // pred_check_branch
      %119 = sbr.rel (0) target = $region49
    $region48: #{tpu_custom_call.1} parent=1 // pred_region
      %121 = dma.done [#allocation3], 128
    $region49: #{tpu_custom_call.1} parent=1 // pred_fallthru
      _
    // Predicated region
    $region50: #{tpu_custom_call.1} parent=1 // pred_check
      _
    $region51: #{tpu_custom_call.1} parent=1 // pred_check_branch
      %123 = sbr.rel (0) target = $region53
    $region52: #{tpu_custom_call.1} parent=1 // pred_region
      %125 = dma.done [#allocation6], 2048
    $region53: #{tpu_custom_call.1} parent=1 // pred_fallthru
      _
    // Predicated region
    $region54: #{tpu_custom_call.1} parent=1 // pred_check
      _
    $region55: #{tpu_custom_call.1} parent=1 // pred_check_branch
      %127 = sbr.rel (0) target = $region57
    $region56: #{tpu_custom_call.1} parent=1 // pred_region
      %129 = dma.done [#allocation6], 32
    $region57: #{tpu_custom_call.1} parent=1 // pred_fallthru
      _
    // Predicated region
    $region58: #{tpu_custom_call.1} parent=1 // pred_check
      _
    $region59: #{tpu_custom_call.1} parent=1 // pred_check_branch
      %131 = sbr.rel (0) target = $region61
    $region60: #{tpu_custom_call.1} parent=1 // pred_region
      %133 = dma.done [#allocation9], 2048
    $region61: #{tpu_custom_call.1} parent=1 // pred_fallthru
      _
    // Predicated region
    $region62: #{tpu_custom_call.1} parent=1 // pred_check
      _
    $region63: #{tpu_custom_call.1} parent=1 // pred_check_branch
      %135 = sbr.rel (0) target = $region65
    $region64: #{tpu_custom_call.1} parent=1 // pred_region
      %137 = dma.done [#allocation9], 1024
    $region65: #{tpu_custom_call.1} parent=1 // pred_fallthru
      _
    // Predicated region
    $region66: #{tpu_custom_call.1} parent=1 // pred_check
      _
    $region67: #{tpu_custom_call.1} parent=1 // pred_check_branch
      %139 = sbr.rel (0) target = $region69
    $region68: #{tpu_custom_call.1} parent=1 // pred_region
      %141 = dma.done [#allocation12], 2048
    $region69: #{tpu_custom_call.1} parent=1 // pred_fallthru
      _
    // Predicated region
    $region70: #{tpu_custom_call.1} parent=1 // pred_check
      _
    $region71: #{tpu_custom_call.1} parent=1 // pred_check_branch
      %143 = sbr.rel (0) target = $region73
    $region72: #{tpu_custom_call.1} parent=1 // pred_region
      %145 = dma.done [#allocation12], 1024
    $region73: #{tpu_custom_call.1} parent=1 // pred_fallthru
      _
    %v146 = vld [vmem:[#allocation2] sm:$0xf]
    %v147 = vld [vmem:[#allocation2 + $0x4] sm:$0xf]
    %v148 = vld [vmem:[#allocation5] sm:$0xff]
    %v149 = vld [vmem:[#allocation5 + $0x8] sm:$0xff]
    %v150 = vld [vmem:[#allocation5 + $0x10] sm:$0xff]
    %v151 = vld [vmem:[#allocation5 + $0x18] sm:$0xff]
    %v152 = vld [vmem:[#allocation5 + $0x20] sm:$0xff]
    %v153 = vld [vmem:[#allocation5 + $0x28] sm:$0xff]
    %v154 = vld [vmem:[#allocation5 + $0x30] sm:$0xff]
    %v155 = vld [vmem:[#allocation5 + $0x38] sm:$0xff]
    %v156 = vld [vmem:[#allocation5 + $0x40] sm:$0xff]
    %v157 = vld [vmem:[#allocation5 + $0x48] sm:$0xff]
    %v158 = vld [vmem:[#allocation5 + $0x50] sm:$0xff]
    %v159 = vld [vmem:[#allocation5 + $0x58] sm:$0xff]
    %v160 = vld [vmem:[#allocation5 + $0x60] sm:$0xff]
    %v161 = vld [vmem:[#allocation5 + $0x68] sm:$0xff]
    %v162 = vld [vmem:[#allocation5 + $0x70] sm:$0xff]
    %v163 = vld [vmem:[#allocation5 + $0x78] sm:$0xff]
    %v164 = vld [vmem:[#allocation7] sm:$0x3]
    %v166 = vperm.slane %v164, 0
    %v167 = vperm.slane %v164, 1
    %v172 = vunpack.c.l.b16 %v146
    %v173 = vunpack.c.l.b16 %v147
    %v174 = vpack.c.b16 %v173, %v172
    %v192 = vunpack.c.l.b16 %v148
    %v193 = vunpack.c.h.b16 %v148
    %v194 = vunpack.c.l.b16 %v149
    %v195 = vunpack.c.h.b16 %v149
    %v196 = vunpack.c.l.b16 %v150
    %v197 = vunpack.c.h.b16 %v150
    %v198 = vunpack.c.l.b16 %v151
    %v199 = vunpack.c.h.b16 %v151
    %v200 = vunpack.c.l.b16 %v152
    %v201 = vunpack.c.h.b16 %v152
    %v202 = vunpack.c.l.b16 %v153
    %v203 = vunpack.c.h.b16 %v153
    %v204 = vunpack.c.l.b16 %v154
    %v205 = vunpack.c.h.b16 %v154
    %v206 = vunpack.c.l.b16 %v155
    %v207 = vunpack.c.h.b16 %v155
    %v208 = vunpack.c.l.b16 %v156
    %v209 = vunpack.c.h.b16 %v156
    %v210 = vunpack.c.l.b16 %v157
    %v211 = vunpack.c.h.b16 %v157
    %v212 = vunpack.c.l.b16 %v158
    %v213 = vunpack.c.h.b16 %v158
    %v214 = vunpack.c.l.b16 %v159
    %v215 = vunpack.c.h.b16 %v159
    %v216 = vunpack.c.l.b16 %v160
    %v217 = vunpack.c.h.b16 %v160
    %v218 = vunpack.c.l.b16 %v161
    %v219 = vunpack.c.h.b16 %v161
    %v220 = vunpack.c.l.b16 %v162
    %v221 = vunpack.c.h.b16 %v162
    %v222 = vunpack.c.l.b16 %v163
    %v223 = vunpack.c.h.b16 %v163
    %v224 = vpack.c.b16 %v194, %v192
    %v225 = vpack.c.b16 %v195, %v193
    %v226 = vpack.c.b16 %v198, %v196
    %v227 = vpack.c.b16 %v199, %v197
    %v228 = vpack.c.b16 %v202, %v200
    %v229 = vpack.c.b16 %v203, %v201
    %v230 = vpack.c.b16 %v206, %v204
    %v231 = vpack.c.b16 %v207, %v205
    %v232 = vpack.c.b16 %v210, %v208
    %v233 = vpack.c.b16 %v211, %v209
    %v234 = vpack.c.b16 %v214, %v212
    %v235 = vpack.c.b16 %v215, %v213
    %v236 = vpack.c.b16 %v218, %v216
    %v237 = vpack.c.b16 %v219, %v217
    %v238 = vpack.c.b16 %v222, %v220
    %v239 = vpack.c.b16 %v223, %v221
    %256 = vmatpush.bf16.msra.mxu0 %v238
    %257 = vmatpush.bf16.msra.mxu0 %v236
    %258 = vmatpush.bf16.msra.mxu0 %v234
    %259 = vmatpush.bf16.msra.mxu0 %v232
    %260 = vmatpush.bf16.msra.mxu0 %v230
    %261 = vmatpush.bf16.msra.mxu0 %v228
    %262 = vmatpush.bf16.msra.mxu0 %v226
    %263 = vmatpush.bf16.msra.mxu0 %v224
    %264 = vmatmul.bf16.gmra.mxu0 %v174
    %v265 = vpop.f32.mrf.mxu0
    %v266 = vadd.f32 %v166, %v265
    %v267 = vpop.f32.mrf.mxu0
    %v268 = vadd.f32 %v166, %v267
    %269 = vdwg.mxu0
    %270 = vmatpush.bf16.msra.mxu0 %v239
    %271 = vmatpush.bf16.msra.mxu0 %v237
    %272 = vmatpush.bf16.msra.mxu0 %v235
    %273 = vmatpush.bf16.msra.mxu0 %v233
    %274 = vmatpush.bf16.msra.mxu0 %v231
    %275 = vmatpush.bf16.msra.mxu0 %v229
    %276 = vmatpush.bf16.msra.mxu0 %v227
    %277 = vmatpush.bf16.msra.mxu0 %v225
    %278 = vmatmul.bf16.gmra.mxu0 %v174
    %v279 = vpop.f32.mrf.mxu0
    %v280 = vadd.f32 %v167, %v279
    %v281 = vpop.f32.mrf.mxu0
    %v282 = vadd.f32 %v167, %v281
    %283 = vdwg.mxu0
    %v284 = vmax.f32 %v266, 0.0
    %v285 = vmax.f32 %v268, 0.0
    %v286 = vadd.f32 %v284, %v280
    %v287 = vadd.f32 %v285, %v282
    %v288 = vpack.c.bf16 %v287, %v286
    %v289 = vld [vmem:[#allocation8] sm:$0xff]
    %v290 = vld [vmem:[#allocation8 + $0x8] sm:$0xff]
    %v291 = vld [vmem:[#allocation8 + $0x10] sm:$0xff]
    %v292 = vld [vmem:[#allocation8 + $0x18] sm:$0xff]
    %v293 = vld [vmem:[#allocation8 + $0x20] sm:$0xff]
    %v294 = vld [vmem:[#allocation8 + $0x28] sm:$0xff]
    %v295 = vld [vmem:[#allocation8 + $0x30] sm:$0xff]
    %v296 = vld [vmem:[#allocation8 + $0x38] sm:$0xff]
    %v297 = vld [vmem:[#allocation8 + $0x40] sm:$0xff]
    %v298 = vld [vmem:[#allocation8 + $0x48] sm:$0xff]
    %v299 = vld [vmem:[#allocation8 + $0x50] sm:$0xff]
    %v300 = vld [vmem:[#allocation8 + $0x58] sm:$0xff]
    %v301 = vld [vmem:[#allocation8 + $0x60] sm:$0xff]
    %v302 = vld [vmem:[#allocation8 + $0x68] sm:$0xff]
    %v303 = vld [vmem:[#allocation8 + $0x70] sm:$0xff]
    %v304 = vld [vmem:[#allocation8 + $0x78] sm:$0xff]
    %v305 = vld [vmem:[%s4] sm:$0x3]
    %v307 = vperm.slane %v305, 0
    %v308 = vperm.slane %v305, 1
    %v327 = vunpack.c.l.b16 %v289
    %v328 = vunpack.c.h.b16 %v289
    %v329 = vunpack.c.l.b16 %v290
    %v330 = vunpack.c.h.b16 %v290
    %v331 = vunpack.c.l.b16 %v291
    %v332 = vunpack.c.h.b16 %v291
    %v333 = vunpack.c.l.b16 %v292
    %v334 = vunpack.c.h.b16 %v292
    %v335 = vunpack.c.l.b16 %v293
    %v336 = vunpack.c.h.b16 %v293
    %v337 = vunpack.c.l.b16 %v294
    %v338 = vunpack.c.h.b16 %v294
    %v339 = vunpack.c.l.b16 %v295
    %v340 = vunpack.c.h.b16 %v295
    %v341 = vunpack.c.l.b16 %v296
    %v342 = vunpack.c.h.b16 %v296
    %v343 = vunpack.c.l.b16 %v297
    %v344 = vunpack.c.h.b16 %v297
    %v345 = vunpack.c.l.b16 %v298
    %v346 = vunpack.c.h.b16 %v298
    %v347 = vunpack.c.l.b16 %v299
    %v348 = vunpack.c.h.b16 %v299
    %v349 = vunpack.c.l.b16 %v300
    %v350 = vunpack.c.h.b16 %v300
    %v351 = vunpack.c.l.b16 %v301
    %v352 = vunpack.c.h.b16 %v301
    %v353 = vunpack.c.l.b16 %v302
    %v354 = vunpack.c.h.b16 %v302
    %v355 = vunpack.c.l.b16 %v303
    %v356 = vunpack.c.h.b16 %v303
    %v357 = vunpack.c.l.b16 %v304
    %v358 = vunpack.c.h.b16 %v304
    %v359 = vpack.c.b16 %v329, %v327
    %v360 = vpack.c.b16 %v330, %v328
    %v361 = vpack.c.b16 %v333, %v331
    %v362 = vpack.c.b16 %v334, %v332
    %v363 = vpack.c.b16 %v337, %v335
    %v364 = vpack.c.b16 %v338, %v336
    %v365 = vpack.c.b16 %v341, %v339
    %v366 = vpack.c.b16 %v342, %v340
    %v367 = vpack.c.b16 %v345, %v343
    %v368 = vpack.c.b16 %v346, %v344
    %v369 = vpack.c.b16 %v349, %v347
    %v370 = vpack.c.b16 %v350, %v348
    %v371 = vpack.c.b16 %v353, %v351
    %v372 = vpack.c.b16 %v354, %v352
    %v373 = vpack.c.b16 %v357, %v355
    %v374 = vpack.c.b16 %v358, %v356
    %391 = vmatpush.bf16.msra.mxu0 %v373
    %392 = vmatpush.bf16.msra.mxu0 %v371
    %393 = vmatpush.bf16.msra.mxu0 %v369
    %394 = vmatpush.bf16.msra.mxu0 %v367
    %395 = vmatpush.bf16.msra.mxu0 %v365
    %396 = vmatpush.bf16.msra.mxu0 %v363
    %397 = vmatpush.bf16.msra.mxu0 %v361
    %398 = vmatpush.bf16.msra.mxu0 %v359
    %399 = vmatmul.bf16.gmra.mxu0 %v288
    %v400 = vpop.f32.mrf.mxu0
    %v401 = vadd.f32 %v307, %v400
    %v402 = vpop.f32.mrf.mxu0
    %v403 = vadd.f32 %v307, %v402
    %404 = vdwg.mxu0
    %405 = vmatpush.bf16.msra.mxu0 %v374
    %406 = vmatpush.bf16.msra.mxu0 %v372
    %407 = vmatpush.bf16.msra.mxu0 %v370
    %408 = vmatpush.bf16.msra.mxu0 %v368
    %409 = vmatpush.bf16.msra.mxu0 %v366
    %410 = vmatpush.bf16.msra.mxu0 %v364
    %411 = vmatpush.bf16.msra.mxu0 %v362
    %412 = vmatpush.bf16.msra.mxu0 %v360
    %413 = vmatmul.bf16.gmra.mxu0 %v288
    %v414 = vpop.f32.mrf.mxu0
    %v415 = vadd.f32 %v308, %v414
    %v416 = vpop.f32.mrf.mxu0
    %v417 = vadd.f32 %v308, %v416
    %418 = vdwg.mxu0
    %v419 = vmax.f32 %v401, 0.0
    %v420 = vmax.f32 %v403, 0.0
    %v421 = vadd.f32 %v419, %v415
    %v422 = vadd.f32 %v420, %v417
    %v423 = vpack.c.bf16 %v421, %v421
    %v424 = vpack.c.bf16 %v422, %v422
    %v425 = vld [vmem:[#allocation10] sm:$0xf]
    %v426 = vld [vmem:[#allocation10 + $0x4] sm:$0xf]
    %v427 = vld [vmem:[#allocation10 + $0x8] sm:$0xf]
    %v428 = vld [vmem:[#allocation10 + $0xc] sm:$0xf]
    %v429 = vld [vmem:[#allocation10 + $0x10] sm:$0xf]
    %v430 = vld [vmem:[#allocation10 + $0x14] sm:$0xf]
    %v431 = vld [vmem:[#allocation10 + $0x18] sm:$0xf]
    %v432 = vld [vmem:[#allocation10 + $0x1c] sm:$0xf]
    %v433 = vld [vmem:[#allocation10 + $0x20] sm:$0xf]
    %v434 = vld [vmem:[#allocation10 + $0x24] sm:$0xf]
    %v435 = vld [vmem:[#allocation10 + $0x28] sm:$0xf]
    %v436 = vld [vmem:[#allocation10 + $0x2c] sm:$0xf]
    %v437 = vld [vmem:[#allocation10 + $0x30] sm:$0xf]
    %v438 = vld [vmem:[#allocation10 + $0x34] sm:$0xf]
    %v439 = vld [vmem:[#allocation10 + $0x38] sm:$0xf]
    %v440 = vld [vmem:[#allocation10 + $0x3c] sm:$0xf]
    %v441 = vld [vmem:[%s6] sm:$0x1]
    %v443 = vperm.slane %v441, 0
    %v447 = vunpack.c.l.b16 %v423
    %v448 = vunpack.c.l.b16 %v424
    %v449 = vpack.c.b16 %v448, %v447
    %v467 = vunpack.c.l.b16 %v425
    %v468 = vunpack.c.l.b16 %v426
    %v469 = vunpack.c.l.b16 %v427
    %v470 = vunpack.c.l.b16 %v428
    %v471 = vunpack.c.l.b16 %v429
    %v472 = vunpack.c.l.b16 %v430
    %v473 = vunpack.c.l.b16 %v431
    %v474 = vunpack.c.l.b16 %v432
    %v475 = vunpack.c.l.b16 %v433
    %v476 = vunpack.c.l.b16 %v434
    %v477 = vunpack.c.l.b16 %v435
    %v478 = vunpack.c.l.b16 %v436
    %v479 = vunpack.c.l.b16 %v437
    %v480 = vunpack.c.l.b16 %v438
    %v481 = vunpack.c.l.b16 %v439
    %v482 = vunpack.c.l.b16 %v440
    %v483 = vpack.c.b16 %v468, %v467
    %v484 = vpack.c.b16 %v470, %v469
    %v485 = vpack.c.b16 %v472, %v471
    %v486 = vpack.c.b16 %v474, %v473
    %v487 = vpack.c.b16 %v476, %v475
    %v488 = vpack.c.b16 %v478, %v477
    %v489 = vpack.c.b16 %v480, %v479
    %v490 = vpack.c.b16 %v482, %v481
    %499 = vmatpush.bf16.msra.mxu0 %v490
    %500 = vmatpush.bf16.msra.mxu0 %v489
    %501 = vmatpush.bf16.msra.mxu0 %v488
    %502 = vmatpush.bf16.msra.mxu0 %v487
    %503 = vmatpush.bf16.msra.mxu0 %v486
    %504 = vmatpush.bf16.msra.mxu0 %v485
    %505 = vmatpush.bf16.msra.mxu0 %v484
    %506 = vmatpush.bf16.msra.mxu0 %v483
    %507 = vmatmul.bf16.gmra.mxu0 %v449
    %v508 = vpop.f32.mrf.mxu0
    %v509 = vadd.f32 %v443, %v508
    %v510 = vpop.f32.mrf.mxu0
    %v511 = vadd.f32 %v443, %v510
    %512 = vdwg.mxu0
    %v513 = vmax.f32 %v509, 0.0
    %v514 = vmax.f32 %v511, 0.0
    %v515 = vunpack.c.l.bf16 %v423
    %v516 = vunpack.c.l.bf16 %v424
    %v517 = vadd.f32 %v513, %v515
    %v518 = vadd.f32 %v514, %v516
    %v519 = vpack.c.bf16 %v518, %v517
    %v520 = vld [vmem:[#allocation11] sm:$0xff]
    %v521 = vld [vmem:[#allocation11 + $0x8] sm:$0xff]
    %v522 = vld [vmem:[#allocation11 + $0x10] sm:$0xff]
    %v523 = vld [vmem:[#allocation11 + $0x18] sm:$0xff]
    %v524 = vld [vmem:[#allocation11 + $0x20] sm:$0xff]
    %v525 = vld [vmem:[#allocation11 + $0x28] sm:$0xff]
    %v526 = vld [vmem:[#allocation11 + $0x30] sm:$0xff]
    %v527 = vld [vmem:[#allocation11 + $0x38] sm:$0xff]
    %v528 = vld [vmem:[#allocation11 + $0x40] sm:$0xff]
    %v529 = vld [vmem:[#allocation11 + $0x48] sm:$0xff]
    %v530 = vld [vmem:[#allocation11 + $0x50] sm:$0xff]
    %v531 = vld [vmem:[#allocation11 + $0x58] sm:$0xff]
    %v532 = vld [vmem:[#allocation11 + $0x60] sm:$0xff]
    %v533 = vld [vmem:[#allocation11 + $0x68] sm:$0xff]
    %v534 = vld [vmem:[#allocation11 + $0x70] sm:$0xff]
    %v535 = vld [vmem:[#allocation11 + $0x78] sm:$0xff]
    %v536 = vld [vmem:[%s8] sm:$0x3]
    %v538 = vperm.slane %v536, 0
    %v539 = vperm.slane %v536, 1
    %v558 = vunpack.c.l.b16 %v520
    %v559 = vunpack.c.h.b16 %v520
    %v560 = vunpack.c.l.b16 %v521
    %v561 = vunpack.c.h.b16 %v521
    %v562 = vunpack.c.l.b16 %v522
    %v563 = vunpack.c.h.b16 %v522
    %v564 = vunpack.c.l.b16 %v523
    %v565 = vunpack.c.h.b16 %v523
    %v566 = vunpack.c.l.b16 %v524
    %v567 = vunpack.c.h.b16 %v524
    %v568 = vunpack.c.l.b16 %v525
    %v569 = vunpack.c.h.b16 %v525
    %v570 = vunpack.c.l.b16 %v526
    %v571 = vunpack.c.h.b16 %v526
    %v572 = vunpack.c.l.b16 %v527
    %v573 = vunpack.c.h.b16 %v527
    %v574 = vunpack.c.l.b16 %v528
    %v575 = vunpack.c.h.b16 %v528
    %v576 = vunpack.c.l.b16 %v529
    %v577 = vunpack.c.h.b16 %v529
    %v578 = vunpack.c.l.b16 %v530
    %v579 = vunpack.c.h.b16 %v530
    %v580 = vunpack.c.l.b16 %v531
    %v581 = vunpack.c.h.b16 %v531
    %v582 = vunpack.c.l.b16 %v532
    %v583 = vunpack.c.h.b16 %v532
    %v584 = vunpack.c.l.b16 %v533
    %v585 = vunpack.c.h.b16 %v533
    %v586 = vunpack.c.l.b16 %v534
    %v587 = vunpack.c.h.b16 %v534
    %v588 = vunpack.c.l.b16 %v535
    %v589 = vunpack.c.h.b16 %v535
    %v590 = vpack.c.b16 %v560, %v558
    %v591 = vpack.c.b16 %v561, %v559
    %v592 = vpack.c.b16 %v564, %v562
    %v593 = vpack.c.b16 %v565, %v563
    %v594 = vpack.c.b16 %v568, %v566
    %v595 = vpack.c.b16 %v569, %v567
    %v596 = vpack.c.b16 %v572, %v570
    %v597 = vpack.c.b16 %v573, %v571
    %v598 = vpack.c.b16 %v576, %v574
    %v599 = vpack.c.b16 %v577, %v575
    %v600 = vpack.c.b16 %v580, %v578
    %v601 = vpack.c.b16 %v581, %v579
    %v602 = vpack.c.b16 %v584, %v582
    %v603 = vpack.c.b16 %v585, %v583
    %v604 = vpack.c.b16 %v588, %v586
    %v605 = vpack.c.b16 %v589, %v587
    %622 = vmatpush.bf16.msra.mxu0 %v604
    %623 = vmatpush.bf16.msra.mxu0 %v602
    %624 = vmatpush.bf16.msra.mxu0 %v600
    %625 = vmatpush.bf16.msra.mxu0 %v598
    %626 = vmatpush.bf16.msra.mxu0 %v596
    %627 = vmatpush.bf16.msra.mxu0 %v594
    %628 = vmatpush.bf16.msra.mxu0 %v592
    %629 = vmatpush.bf16.msra.mxu0 %v590
    %630 = vmatmul.bf16.gmra.mxu0 %v519
    %v631 = vpop.f32.mrf.mxu0
    %v632 = vadd.f32 %v538, %v631
    %v633 = vpop.f32.mrf.mxu0
    %v634 = vadd.f32 %v538, %v633
    %635 = vdwg.mxu0
    %636 = vmatpush.bf16.msra.mxu0 %v605
    %637 = vmatpush.bf16.msra.mxu0 %v603
    %638 = vmatpush.bf16.msra.mxu0 %v601
    %639 = vmatpush.bf16.msra.mxu0 %v599
    %640 = vmatpush.bf16.msra.mxu0 %v597
    %641 = vmatpush.bf16.msra.mxu0 %v595
    %642 = vmatpush.bf16.msra.mxu0 %v593
    %643 = vmatpush.bf16.msra.mxu0 %v591
    %644 = vmatmul.bf16.gmra.mxu0 %v519
    %v645 = vpop.f32.mrf.mxu0
    %v646 = vadd.f32 %v539, %v645
    %v647 = vpop.f32.mrf.mxu0
    %v648 = vadd.f32 %v539, %v647
    %649 = vdwg.mxu0
    %v650 = vmax.f32 %v632, 0.0
    %v651 = vmax.f32 %v634, 0.0
    %v652 = vadd.f32 %v650, %v646
    %v653 = vadd.f32 %v651, %v648
    %v654 = vpack.c.bf16 %v653, %v652
    %v655 = vld [vmem:[#allocation13] sm:$0xf]
    %v656 = vld [vmem:[#allocation13 + $0x4] sm:$0xf]
    %v657 = vld [vmem:[#allocation13 + $0x8] sm:$0xf]
    %v658 = vld [vmem:[#allocation13 + $0xc] sm:$0xf]
    %v659 = vld [vmem:[#allocation13 + $0x10] sm:$0xf]
    %v660 = vld [vmem:[#allocation13 + $0x14] sm:$0xf]
    %v661 = vld [vmem:[#allocation13 + $0x18] sm:$0xf]
    %v662 = vld [vmem:[#allocation13 + $0x1c] sm:$0xf]
    %v663 = vld [vmem:[#allocation13 + $0x20] sm:$0xf]
    %v664 = vld [vmem:[#allocation13 + $0x24] sm:$0xf]
    %v665 = vld [vmem:[#allocation13 + $0x28] sm:$0xf]
    %v666 = vld [vmem:[#allocation13 + $0x2c] sm:$0xf]
    %v667 = vld [vmem:[#allocation13 + $0x30] sm:$0xf]
    %v668 = vld [vmem:[#allocation13 + $0x34] sm:$0xf]
    %v669 = vld [vmem:[#allocation13 + $0x38] sm:$0xf]
    %v670 = vld [vmem:[#allocation13 + $0x3c] sm:$0xf]
    %v671 = vld [vmem:[%s10] sm:$0x1]
    %v673 = vperm.slane %v671, 0
    %v691 = vunpack.c.l.b16 %v655
    %v692 = vunpack.c.l.b16 %v656
    %v693 = vunpack.c.l.b16 %v657
    %v694 = vunpack.c.l.b16 %v658
    %v695 = vunpack.c.l.b16 %v659
    %v696 = vunpack.c.l.b16 %v660
    %v697 = vunpack.c.l.b16 %v661
    %v698 = vunpack.c.l.b16 %v662
    %v699 = vunpack.c.l.b16 %v663
    %v700 = vunpack.c.l.b16 %v664
    %v701 = vunpack.c.l.b16 %v665
    %v702 = vunpack.c.l.b16 %v666
    %v703 = vunpack.c.l.b16 %v667
    %v704 = vunpack.c.l.b16 %v668
    %v705 = vunpack.c.l.b16 %v669
    %v706 = vunpack.c.l.b16 %v670
    %v707 = vpack.c.b16 %v692, %v691
    %v708 = vpack.c.b16 %v694, %v693
    %v709 = vpack.c.b16 %v696, %v695
    %v710 = vpack.c.b16 %v698, %v697
    %v711 = vpack.c.b16 %v700, %v699
    %v712 = vpack.c.b16 %v702, %v701
    %v713 = vpack.c.b16 %v704, %v703
    %v714 = vpack.c.b16 %v706, %v705
    %723 = vmatpush.bf16.msra.mxu0 %v714
    %724 = vmatpush.bf16.msra.mxu0 %v713
    %725 = vmatpush.bf16.msra.mxu0 %v712
    %726 = vmatpush.bf16.msra.mxu0 %v711
    %727 = vmatpush.bf16.msra.mxu0 %v710
    %728 = vmatpush.bf16.msra.mxu0 %v709
    %729 = vmatpush.bf16.msra.mxu0 %v708
    %730 = vmatpush.bf16.msra.mxu0 %v707
    %731 = vmatmul.bf16.gmra.mxu0 %v654
    %v732 = vpop.f32.mrf.mxu0
    %v733 = vadd.f32 %v673, %v732
    %v734 = vpop.f32.mrf.mxu0
    %v735 = vadd.f32 %v673, %v734
    %736 = vdwg.mxu0
    %v737 = vpack.c.bf16 %v733, %v733
    %v738 = vpack.c.bf16 %v735, %v735
    %739 = vst [vmem:[#allocation14] sm:$0xf] %v737
    %740 = vst [vmem:[#allocation14 + $0x4] sm:$0xf] %v738
    // Predicated region
    $region74: #{tpu_custom_call.1} parent=1 // pred_check
      _
    $region75: #{tpu_custom_call.1} parent=1 // pred_check_branch
      %742 = sbr.rel (0) target = $region77
    $region76: #{tpu_custom_call.1} parent=1 // pred_region
      %744 = vsyncadd [#allocation4], 0
      %s745 = sshll.u32 [#allocation14], 4
      %s746 = int_to_ptr.vmem [resolvable:$true] %s745
      %s747 = sshll.u32 %s11, 4
      %s748 = int_to_ptr.hbm [resolvable:$true] %s747
      %753 = dma.vmem_to_hbm [thread:$0]  %s746, 128, %s748, [#allocation4], 64, 64, 4
    $region77: #{tpu_custom_call.1} parent=1 // pred_fallthru
      _
    // Predicated region
    $region78: #{tpu_custom_call.1} parent=1 // pred_check
      _
    $region79: #{tpu_custom_call.1} parent=1 // pred_check_branch
      %755 = sbr.rel (0) target = $region81
    $region80: #{tpu_custom_call.1} parent=1 // pred_region
      %757 = dma.done [#allocation4], 128
    $region81: #{tpu_custom_call.1} parent=1 // pred_fallthru
      _
    %758 = vsyncpa [#allocation3], 1
    %759 = vsyncpa [#allocation6], 1
    %760 = vsyncpa [#allocation9], 1
    %761 = vsyncpa [#allocation12], 1
    %762 = vsyncpa [#allocation4], 1

</llo_original>
